<compile_context>
chip_gen: v6e
topology: v6e:2x2x1
jax: 0.10.0
libtpu: 0.0.40
codegen_flags: <defaults>
</compile_context>

<pallas_src>
import math

import jax
import jax.numpy as jnp
from jax.experimental import pallas as pl
from jax.experimental.pallas import tpu as pltpu


def _gelu_tanh(x):
    # GPT-2 style GELU (tanh approximation), matching HF ACT2FN["gelu_new"].
    c = math.sqrt(2.0 / math.pi)
    return 0.5 * x * (1.0 + jnp.tanh(c * (x + 0.044715 * x * x * x)))


def _inner_mlp_kernel(x_ref, wfc_ref, bfc_ref, wproj_ref, bproj_ref, o_ref, acc_ref):
    k = pl.program_id(1)

    @pl.when(k == 0)
    def _init():
        acc_ref[...] = jnp.zeros_like(acc_ref)

    # c_fc slice: (tm, H) @ (H, tI) -> (tm, tI), f32 accumulation on the MXU.
    h = jnp.dot(x_ref[...], wfc_ref[...], preferred_element_type=jnp.float32)
    h = _gelu_tanh(h + bfc_ref[...])                    # bias is already f32
    # c_proj slice: feed the MXU in the weight dtype, accumulate f32 across the I tiles.
    h = h.astype(wproj_ref.dtype)
    acc_ref[...] += jnp.dot(h, wproj_ref[...], preferred_element_type=jnp.float32)

    @pl.when(k == pl.num_programs(1) - 1)
    def _store():
        # TODO(synk): nn.Dropout(resid_dropout) is identity at inference; not applied.
        o_ref[...] = (acc_ref[...] + bproj_ref[...]).astype(o_ref.dtype)


def _round_up(x, m):
    return ((x + m - 1) // m) * m


def inner_mlp(hidden_states, w_fc, b_fc, w_proj, b_proj, *,
              block_rows=None, block_inner=None):
    """Pallas implementation of InnerMLP.forward (eval mode).

    hidden_states: (..., H); w_fc: (H, I); b_fc: (I,); w_proj: (I, H); b_proj: (H,).
    Weights are passed in "x @ W" layout (PyTorch nn.Linear weight transposed).
    Note: production H/I should be 128-aligned for full lane utilization; smaller
    values (as in the demo) still run, just with masked lanes.
    """
    orig_shape = hidden_states.shape
    H = orig_shape[-1]
    I = w_fc.shape[-1]
    M = int(math.prod(orig_shape[:-1]))

    x2 = hidden_states.reshape(M, H)
    b_fc2 = b_fc.astype(jnp.float32).reshape(1, I)
    b_proj2 = b_proj.astype(jnp.float32).reshape(1, H)

    in_bytes = jnp.dtype(hidden_states.dtype).itemsize
    out_bytes = in_bytes
    w_bytes = jnp.dtype(w_fc.dtype).itemsize

    # --- Generation-aware VMEM budget (v7x: 64 MiB/TC, v5e/v6e: 128 MiB).
    try:
        vmem_cap = int(pltpu.get_tpu_info().vmem_capacity_bytes)
    except Exception:
        vmem_cap = 64 * 1024 * 1024          # conservative fallback (v7x per-TC)
    budget = int(0.7 * vmem_cap)

    # --- Inner-dim tile: keep full weights resident (single-buffered) when they fit
    # --- half the budget; otherwise take the largest 128-multiple divisor of I whose
    # --- double-buffered weight slices fit half the budget.
    if block_inner is not None:
        tI = block_inner
    elif (2 * H * I) * w_bytes <= budget // 2 or I % 128 != 0:
        tI = I
    else:
        cap = max(128, (budget // 2) // (4 * H * w_bytes))
        tI = 128
        d = 256
        while d <= min(I, cap):
            if I % d == 0:
                tI = d
            d += 128
    num_k = pl.cdiv(I, tI)
    resident_weights = (num_k == 1)          # constant index maps -> single buffer
    w_bufs = 1 if resident_weights else 2
    weight_vmem = w_bufs * (2 * H * tI) * w_bytes + w_bufs * tI * 4 + H * 4

    # --- Row tile: biggest power-of-two <= 512 whose blocks + f32 intermediates fit
    # --- the remaining budget.  Align to 16 rows for bf16 sublane packing (8 min).
    row_align = 16 if in_bytes == 2 else (32 if in_bytes == 1 else 8)
    if block_rows is None:
        block_rows = 512
    per_row = 2 * H * (in_bytes + out_bytes) + tI * 4 + H * 4
    while block_rows > row_align and weight_vmem + block_rows * per_row > budget:
        block_rows //= 2
    block_rows = max(8, min(block_rows, _round_up(M, row_align)))
    block_rows = _round_up(block_rows, 8)
    # Give both v7x TensorCores a row block when possible (harmless on 1-TC chips).
    if M >= 16 and -(-M // block_rows) < 2:
        block_rows = max(8, _round_up(-(-M // 2), 8))

    grid = (pl.cdiv(M, block_rows), num_k)

    # --- Honest VMEM estimate + headroom (no double hedging).
    est = weight_vmem + block_rows * per_row
    vmem_limit = int(min(int(0.9 * vmem_cap), int(est * 1.15) + (4 << 20)))

    def _wspec(shape, index_map):
        # Weight/bias slices: single-buffer when their index map is constant.
        if resident_weights:
            return pl.BlockSpec(shape, index_map, pipeline_mode=pl.Buffered(1))
        return pl.BlockSpec(shape, index_map)

    cost = pl.CostEstimate(
        flops=4 * M * H * I,
        transcendentals=M * I,
        bytes_accessed=M * H * (in_bytes + out_bytes) + 2 * H * I * w_bytes + (I + H) * 4,
    )

    out = pl.pallas_call(
        _inner_mlp_kernel,
        out_shape=jax.ShapeDtypeStruct((M, H), hidden_states.dtype),
        grid=grid,
        in_specs=[
            pl.BlockSpec((block_rows, H), lambda i, k: (i, 0)),      # x rows
            _wspec((H, tI), lambda i, k: (0, k)),                    # w_fc slice
            _wspec((1, tI), lambda i, k: (0, k)),                    # b_fc slice (f32)
            _wspec((tI, H), lambda i, k: (k, 0)),                    # w_proj slice
            pl.BlockSpec((1, H), lambda i, k: (0, 0),
                         pipeline_mode=pl.Buffered(1)),              # b_proj (f32)
        ],
        out_specs=pl.BlockSpec((block_rows, H), lambda i, k: (i, 0)),
        scratch_shapes=[pltpu.VMEM((block_rows, H), jnp.float32)],
        compiler_params=pltpu.CompilerParams(
            dimension_semantics=("parallel", "arbitrary"),
            vmem_limit_bytes=vmem_limit,
        ),
        cost_estimate=cost,
    )(x2, w_fc, b_fc2, w_proj, b_proj2)

    return out.reshape(orig_shape)


if __name__ == "__main__":
    key = jax.random.PRNGKey(0)
    B, S, H = 2, 8, 32            # batch, seq, hidden_size
    I = 4 * H                     # intermediate_size = 4 * hidden_size (config default)
    k1, k2, k3, k4, k5 = jax.random.split(key, 5)

    dtype = jnp.bfloat16          # keep the big tensors bf16 through HBM
    x = jax.random.normal(k1, (B, S, H), jnp.float32).astype(dtype)
    w_fc = (jax.random.normal(k2, (H, I), jnp.float32) / math.sqrt(H)).astype(dtype)
    b_fc = (0.1 * jax.random.normal(k3, (I,), jnp.float32)).astype(dtype)
    w_proj = (jax.random.normal(k4, (I, H), jnp.float32) / math.sqrt(I)).astype(dtype)
    b_proj = (0.1 * jax.random.normal(k5, (H,), jnp.float32)).astype(dtype)

    out = inner_mlp(x, w_fc, b_fc, w_proj, b_proj)
    out = jax.block_until_ready(out)

    # Pure-JAX reference (same bf16 inputs, f32 math, same intermediate bf16 cast).
    xf = x.astype(jnp.float32).reshape(-1, H)
    h_ref = xf @ w_fc.astype(jnp.float32) + b_fc.astype(jnp.float32)
    h_ref = _gelu_tanh(h_ref)
    h_ref = h_ref.astype(dtype).astype(jnp.float32)
    y_ref = h_ref @ w_proj.astype(jnp.float32) + b_proj.astype(jnp.float32)
    ref = y_ref.astype(dtype).reshape(B, S, H)

    out_f = out.astype(jnp.float32)
    ref_f = ref.astype(jnp.float32)
    assert jnp.all(jnp.isfinite(out_f)), "non-finite output"
    max_err = float(jnp.max(jnp.abs(out_f - ref_f)))
    assert jnp.allclose(out_f, ref_f, atol=5e-2, rtol=5e-2), max_err
    print("KERNEL_OK")
</pallas_src>

<mosaic_0001>
module attributes {stable_mosaic.version = 11 : i64} {
  func.func @_inner_mlp_kernel(%arg0: i32, %arg1: i32, %arg2: memref<8x32xbf16, #tpu.memory_space<vmem>>, %arg3: memref<32x128xbf16, #tpu.memory_space<vmem>>, %arg4: memref<1x128xf32, #tpu.memory_space<vmem>>, %arg5: memref<128x32xbf16, #tpu.memory_space<vmem>>, %arg6: memref<1x32xf32, #tpu.memory_space<vmem>>, %arg7: memref<8x32xbf16, #tpu.memory_space<vmem>>, %arg8: memref<8x32xf32, #tpu.memory_space<vmem>>) attributes {dimension_semantics = [#tpu.dimension_semantics<parallel>, #tpu.dimension_semantics<arbitrary>], iteration_bounds = array<i64: 2, 1>, scalar_prefetch = 0 : i64, scratch_operands = 1 : i64, tpu.core_type = #tpu.core_type<tc>, window_params = [{transform_indices = @transform_0, window_bounds = array<i64: 8, 32>}, {pipeline_mode = #tpu.pipeline_mode<synchronous>, transform_indices = @transform_1, window_bounds = array<i64: 32, 128>}, {pipeline_mode = #tpu.pipeline_mode<synchronous>, transform_indices = @transform_2, window_bounds = array<i64: 1, 128>}, {pipeline_mode = #tpu.pipeline_mode<synchronous>, transform_indices = @transform_3, window_bounds = array<i64: 128, 32>}, {pipeline_mode = #tpu.pipeline_mode<synchronous>, transform_indices = @transform_4, window_bounds = array<i64: 1, 32>}, {transform_indices = @transform_5, window_bounds = array<i64: 8, 32>}]} {
    %c0_i32 = arith.constant 0 : i32
    %0 = arith.cmpi eq, %arg1, %c0_i32 : i32
    %1 = arith.extui %0 : i1 to i32
    %c0_i32_0 = arith.constant 0 : i32
    %2 = arith.cmpi ne, %1, %c0_i32_0 : i32
    scf.if %2 {
      %cst_19 = arith.constant 0.000000e+00 : f32
      %31 = vector.broadcast %cst_19 : f32 to vector<8x32xf32>
      %c0_20 = arith.constant 0 : index
      %c0_21 = arith.constant 0 : index
      %32 = vector.load %arg8[%c0_20, %c0_21] : memref<8x32xf32, #tpu.memory_space<vmem>>, vector<8x32xf32>
      tpu.vector_store %arg8[%c0_20, %c0_21], %31 {strides = array<i32>} : memref<8x32xf32, #tpu.memory_space<vmem>>, vector<8x32xf32>,
    } else {
    }
    %c0 = arith.constant 0 : index
    %c0_1 = arith.constant 0 : index
    %3 = vector.load %arg2[%c0, %c0_1] : memref<8x32xbf16, #tpu.memory_space<vmem>>, vector<8x32xbf16>
    %c0_2 = arith.constant 0 : index
    %c0_3 = arith.constant 0 : index
    %4 = vector.load %arg3[%c0_2, %c0_3] : memref<32x128xbf16, #tpu.memory_space<vmem>>, vector<32x128xbf16>
    %cst = arith.constant dense<0.000000e+00> : vector<8x128xf32>
    %5 = tpu.matmul %3, %4, %cst {dimension_numbers = #tpu.dot_dimension_numbers<[1], [0], [0], [1], [0, 0, 1, 1], [], []>} : vector<8x32xbf16>, vector<32x128xbf16>, vector<8x128xf32> -> vector<8x128xf32>
    %c0_4 = arith.constant 0 : index
    %c0_5 = arith.constant 0 : index
    %6 = vector.load %arg4[%c0_4, %c0_5] : memref<1x128xf32, #tpu.memory_space<vmem>>, vector<1x128xf32>
    %7 = vector.broadcast %6 : vector<1x128xf32> to vector<8x128xf32>
    %8 = arith.addf %5, %7 : vector<8x128xf32>
    %cst_6 = arith.constant 5.000000e-01 : f32
    %9 = vector.broadcast %cst_6 : f32 to vector<8x128xf32>
    %10 = arith.mulf %9, %8 : vector<8x128xf32>
    %cst_7 = arith.constant 4.471500e-02 : f32
    %11 = vector.broadcast %cst_7 : f32 to vector<8x128xf32>
    %12 = arith.mulf %11, %8 : vector<8x128xf32>
    %13 = arith.mulf %12, %8 : vector<8x128xf32>
    %14 = arith.mulf %13, %8 : vector<8x128xf32>
    %15 = arith.addf %8, %14 : vector<8x128xf32>
    %cst_8 = arith.constant 0.797884583 : f32
    %16 = vector.broadcast %cst_8 : f32 to vector<8x128xf32>
    %17 = arith.mulf %16, %15 : vector<8x128xf32>
    %18 = math.tanh %17 : vector<8x128xf32>
    %cst_9 = arith.constant 1.000000e+00 : f32
    %19 = vector.broadcast %cst_9 : f32 to vector<8x128xf32>
    %20 = arith.addf %19, %18 : vector<8x128xf32>
    %21 = arith.mulf %10, %20 : vector<8x128xf32>
    %22 = arith.truncf %21 : vector<8x128xf32> to vector<8x128xbf16>
    %c0_10 = arith.constant 0 : index
    %c0_11 = arith.constant 0 : index
    %23 = vector.load %arg8[%c0_10, %c0_11] : memref<8x32xf32, #tpu.memory_space<vmem>>, vector<8x32xf32>
    %c0_12 = arith.constant 0 : index
    %c0_13 = arith.constant 0 : index
    %24 = vector.load %arg5[%c0_12, %c0_13] : memref<128x32xbf16, #tpu.memory_space<vmem>>, vector<128x32xbf16>
    %cst_14 = arith.constant dense<0.000000e+00> : vector<8x32xf32>
    %25 = tpu.matmul %22, %24, %cst_14 {dimension_numbers = #tpu.dot_dimension_numbers<[1], [0], [0], [1], [0, 0, 1, 1], [], []>} : vector<8x128xbf16>, vector<128x32xbf16>, vector<8x32xf32> -> vector<8x32xf32>
    %26 = arith.addf %23, %25 : vector<8x32xf32>
    %c0_15 = arith.constant 0 : index
    %c0_16 = arith.constant 0 : index
    %27 = vector.load %arg8[%c0_15, %c0_16] : memref<8x32xf32, #tpu.memory_space<vmem>>, vector<8x32xf32>
    tpu.vector_store %arg8[%c0_15, %c0_16], %26 {strides = array<i32>} : memref<8x32xf32, #tpu.memory_space<vmem>>, vector<8x32xf32>,
    %c0_i32_17 = arith.constant 0 : i32
    %28 = arith.cmpi eq, %arg1, %c0_i32_17 : i32
    %29 = arith.extui %28 : i1 to i32
    %c0_i32_18 = arith.constant 0 : i32
    %30 = arith.cmpi ne, %29, %c0_i32_18 : i32
    scf.if %30 {
      %c0_19 = arith.constant 0 : index
      %c0_20 = arith.constant 0 : index
      %31 = vector.load %arg8[%c0_19, %c0_20] : memref<8x32xf32, #tpu.memory_space<vmem>>, vector<8x32xf32>
      %c0_21 = arith.constant 0 : index
      %c0_22 = arith.constant 0 : index
      %32 = vector.load %arg6[%c0_21, %c0_22] : memref<1x32xf32, #tpu.memory_space<vmem>>, vector<1x32xf32>
      %33 = vector.broadcast %32 : vector<1x32xf32> to vector<8x32xf32>
      %34 = arith.addf %31, %33 : vector<8x32xf32>
      %35 = arith.truncf %34 : vector<8x32xf32> to vector<8x32xbf16>
      %c0_23 = arith.constant 0 : index
      %c0_24 = arith.constant 0 : index
      %36 = vector.load %arg7[%c0_23, %c0_24] : memref<8x32xbf16, #tpu.memory_space<vmem>>, vector<8x32xbf16>
      tpu.vector_store %arg7[%c0_23, %c0_24], %35 {strides = array<i32>} : memref<8x32xbf16, #tpu.memory_space<vmem>>, vector<8x32xbf16>,
    } else {
    }
    return
  }
  func.func @transform_0(%arg0: i32, %arg1: i32) -> (i32, i32) {
    %c0_i32 = arith.constant 0 : i32
    %c0_i32_0 = arith.constant 0 : i32
    return %arg0, %c0_i32 : i32, i32
  }
  func.func @transform_1(%arg0: i32, %arg1: i32) -> (i32, i32) {
    %c0_i32 = arith.constant 0 : i32
    %c0_i32_0 = arith.constant 0 : i32
    return %c0_i32, %arg1 : i32, i32
  }
  func.func @transform_2(%arg0: i32, %arg1: i32) -> (i32, i32) {
    %c0_i32 = arith.constant 0 : i32
    %c0_i32_0 = arith.constant 0 : i32
    return %c0_i32, %arg1 : i32, i32
  }
  func.func @transform_3(%arg0: i32, %arg1: i32) -> (i32, i32) {
    %c0_i32 = arith.constant 0 : i32
    %c0_i32_0 = arith.constant 0 : i32
    return %arg1, %c0_i32 : i32, i32
  }
  func.func @transform_4(%arg0: i32, %arg1: i32) -> (i32, i32) {
    %c0_i32 = arith.constant 0 : i32
    %c0_i32_0 = arith.constant 0 : i32
    %c0_i32_1 = arith.constant 0 : i32
    return %c0_i32, %c0_i32_0 : i32, i32
  }
  func.func @transform_5(%arg0: i32, %arg1: i32) -> (i32, i32) {
    %c0_i32 = arith.constant 0 : i32
    %c0_i32_0 = arith.constant 0 : i32
    return %arg0, %c0_i32 : i32, i32
  }
}

</mosaic_0001>

<llo_original>
// kernel: tpu_custom_call.1
$region0: #{tpu_custom_call.1}
  #allocation0 [shape = 'u32[]', space=smem, size = 0x4, offset = 0x4, fixed_abs, tag = 'smem constant byte address 0x4 - core index']
  #allocation1 [shape = 'u32[144,128]{1,0:T(1,128)}', space=vmem, size = 0x12000, scoped, tag = 'internal scratch']
  #allocation2 [shape = 'f32[8,32]{1,0:T(8,128)}', space=vmem, size = 0x1000, scoped, tag = 'scratch operand']
  %s0 = inlined_call_operand.vmem [shape: bf16[16,32], index: 0, kind: input, shape index: {}]
  %s1 = inlined_call_operand.vmem [shape: bf16[32,128], index: 1, kind: input, shape index: {}]
  %s2 = inlined_call_operand.vmem [shape: f32[1,128], index: 2, kind: input, shape index: {}]
  %s3 = inlined_call_operand.vmem [shape: bf16[128,32], index: 3, kind: input, shape index: {}]
  %s4 = inlined_call_operand.vmem [shape: f32[1,32], index: 4, kind: input, shape index: {}]
  %s5 = inlined_call_operand.hbm [shape: bf16[16,32], index: 5, kind: output, shape index: {}]
  %s6 = sld [smem:[#allocation0]]
  $region61: #{tpu_custom_call.1} parent=0
    _
  %s8 = ssub.s32 1, %s6
  %s9 = scalar_select 0, %s8, %s6
  $region1: #{tpu_custom_call.1} parent=0
    #allocation3 [shape = 'u8[4096]{0}', space=vmem, size = 0x1000, scoped, tag = 'output window, operand 0']
    #allocation4 [shape = 's32[2]{0}', space=sflag, size = 0x8, scoped, tag = 'scoped memory for tpu_custom_call.1']
    %10 = vsyncpa [#allocation4], 0
    %s11 = scalar_lea.sflag [#allocation4], 1
    %12 = vsyncpa %s11, 0
    loop: start=0, step=1, limit=4
    $region2: #{tpu_custom_call.1} parent=1 // loop_pre_header
      _
    $region3: #{tpu_custom_call.1} parent=1 // loop_header
      %s14 = sphi 0, %s18
      %p15 = scmp.ge.s32.totalorder %s14, 4
      %s21 = sphi 0, %s33
      %s22 = sphi 0, %s29
      %s23 = sphi 0, %s21
      %s24 = sphi 0, %s22
      %s25 = sphi 0, %s23
      %s26 = sphi 0, %s24
      %s36 = sphi 0, %s38
      %s39 = sphi 0, %s36
      %s40 = sphi 0, %s39
      %s56 = sphi 0, %s40
      %s62 = sphi 0, %s64
      %s65 = sphi 0, %s62
      %s66 = sphi 0, %s65
      %s82 = sphi 0, %s66
      %s88 = sphi 0, %s90
      %s91 = sphi 0, %s88
      %s92 = sphi 0, %s91
      %s108 = sphi 0, %s92
      %s114 = sphi 0, %s116
      %s117 = sphi 0, %s114
      %s118 = sphi 0, %s117
      %s134 = sphi 0, %s118
      %s138 = sphi 0, %s138
      %s140 = sphi 0, %s138
      %s141 = sphi 0, %s140
      %s155 = sphi 0, %s141
      %s161 = sphi 0, %s163
      %s164 = sphi 0, %s161
      %s165 = sphi 0, %s164
      %s181 = sphi 0, %s165
    $region4: #{tpu_custom_call.1} parent=1 // loop_header_branch
      %17 = sbr.rel (%p15) target = $region8
    $region5: #{tpu_custom_call.1} parent=1 // loop_body
      %s19 = ssub.s32 %s14, 1
      %s20 = ssub.s32 %s14, 2
      %s27 = sadd.s32 1, %s22
      %p28 = scmp.ge.s32.totalorder %s27, 1
      %s29 = scalar_select %p28, 0, %s27
      %s30 = sadd.s32 1, %s21
      %s31 = scalar_select %p28, %s30, %s21
      %p32 = scmp.ge.s32.totalorder %s31, 2
      %s33 = scalar_select %p32, 0, %s31
      %s34 = ssub.s32 %s21, %s33
      %p35 = scmp.eq.s32.totalorder %s34, 0
      %s37 = sadd.s32 %s36, 1
      %s38 = scalar_select %p35, %s36, %s37
      %p41 = pneg %p35
      %p42 = scmp.eq.s32.totalorder %s14, 1
      %p43 = por %p41, %p42
      %p44 = scmp.ne.s32.totalorder %s36, %s39
      %p45 = scmp.eq.s32.totalorder %s14, 0
      %p46 = por %p44, %p45
      %p47 = scmp.ne.s32.totalorder %s36, %s39
      %p48 = scmp.eq.s32.totalorder %s19, 1
      %p49 = por %p47, %p48
      %p50 = scmp.ne.s32.totalorder %s39, %s40
      %p51 = scmp.eq.s32.totalorder %s19, 0
      %p52 = por %p50, %p51
      %p53 = scmp.ne.s32.totalorder %s39, %s40
      %p54 = scmp.eq.s32.totalorder %s20, 1
      %p55 = por %p53, %p54
      %p57 = scmp.ne.s32.totalorder %s40, %s56
      %p58 = scmp.eq.s32.totalorder %s20, 0
      %p59 = por %p57, %p58
      %s60 = ssub.s32 %s22, %s29
      %p61 = scmp.eq.s32.totalorder %s60, 0
      %s63 = sadd.s32 %s62, 1
      %s64 = scalar_select %p61, %s62, %s63
      %p67 = pneg %p61
      %p68 = scmp.eq.s32.totalorder %s14, 1
      %p69 = por %p67, %p68
      %p70 = scmp.ne.s32.totalorder %s62, %s65
      %p71 = scmp.eq.s32.totalorder %s14, 0
      %p72 = por %p70, %p71
      %p73 = scmp.ne.s32.totalorder %s62, %s65
      %p74 = scmp.eq.s32.totalorder %s19, 1
      %p75 = por %p73, %p74
      %p76 = scmp.ne.s32.totalorder %s65, %s66
      %p77 = scmp.eq.s32.totalorder %s19, 0
      %p78 = por %p76, %p77
      %p79 = scmp.ne.s32.totalorder %s65, %s66
      %p80 = scmp.eq.s32.totalorder %s20, 1
      %p81 = por %p79, %p80
      %p83 = scmp.ne.s32.totalorder %s66, %s82
      %p84 = scmp.eq.s32.totalorder %s20, 0
      %p85 = por %p83, %p84
      %s86 = ssub.s32 %s22, %s29
      %p87 = scmp.eq.s32.totalorder %s86, 0
      %s89 = sadd.s32 %s88, 1
      %s90 = scalar_select %p87, %s88, %s89
      %p93 = pneg %p87
      %p94 = scmp.eq.s32.totalorder %s14, 1
      %p95 = por %p93, %p94
      %p96 = scmp.ne.s32.totalorder %s88, %s91
      %p97 = scmp.eq.s32.totalorder %s14, 0
      %p98 = por %p96, %p97
      %p99 = scmp.ne.s32.totalorder %s88, %s91
      %p100 = scmp.eq.s32.totalorder %s19, 1
      %p101 = por %p99, %p100
      %p102 = scmp.ne.s32.totalorder %s91, %s92
      %p103 = scmp.eq.s32.totalorder %s19, 0
      %p104 = por %p102, %p103
      %p105 = scmp.ne.s32.totalorder %s91, %s92
      %p106 = scmp.eq.s32.totalorder %s20, 1
      %p107 = por %p105, %p106
      %p109 = scmp.ne.s32.totalorder %s92, %s108
      %p110 = scmp.eq.s32.totalorder %s20, 0
      %p111 = por %p109, %p110
      %s112 = ssub.s32 %s22, %s29
      %p113 = scmp.eq.s32.totalorder %s112, 0
      %s115 = sadd.s32 %s114, 1
      %s116 = scalar_select %p113, %s114, %s115
      %p119 = pneg %p113
      %p120 = scmp.eq.s32.totalorder %s14, 1
      %p121 = por %p119, %p120
      %p122 = scmp.ne.s32.totalorder %s114, %s117
      %p123 = scmp.eq.s32.totalorder %s14, 0
      %p124 = por %p122, %p123
      %p125 = scmp.ne.s32.totalorder %s114, %s117
      %p126 = scmp.eq.s32.totalorder %s19, 1
      %p127 = por %p125, %p126
      %p128 = scmp.ne.s32.totalorder %s117, %s118
      %p129 = scmp.eq.s32.totalorder %s19, 0
      %p130 = por %p128, %p129
      %p131 = scmp.ne.s32.totalorder %s117, %s118
      %p132 = scmp.eq.s32.totalorder %s20, 1
      %p133 = por %p131, %p132
      %p135 = scmp.ne.s32.totalorder %s118, %s134
      %p136 = scmp.eq.s32.totalorder %s20, 0
      %p137 = por %p135, %p136
      %s139 = sadd.s32 %s138, 1
      %p142 = scmp.eq.s32.totalorder %s14, 1
      %p143 = scmp.ne.s32.totalorder %s138, %s140
      %p144 = scmp.eq.s32.totalorder %s14, 0
      %p145 = por %p143, %p144
      %p146 = scmp.ne.s32.totalorder %s138, %s140
      %p147 = scmp.eq.s32.totalorder %s19, 1
      %p148 = por %p146, %p147
      %p149 = scmp.ne.s32.totalorder %s140, %s141
      %p150 = scmp.eq.s32.totalorder %s19, 0
      %p151 = por %p149, %p150
      %p152 = scmp.ne.s32.totalorder %s140, %s141
      %p153 = scmp.eq.s32.totalorder %s20, 1
      %p154 = por %p152, %p153
      %p156 = scmp.ne.s32.totalorder %s141, %s155
      %p157 = scmp.eq.s32.totalorder %s20, 0
      %p158 = por %p156, %p157
      %s159 = ssub.s32 %s21, %s33
      %p160 = scmp.eq.s32.totalorder %s159, 0
      %s162 = sadd.s32 %s161, 1
      %s163 = scalar_select %p160, %s161, %s162
      %p166 = pneg %p160
      %p167 = scmp.eq.s32.totalorder %s14, 1
      %p168 = por %p166, %p167
      %p169 = scmp.ne.s32.totalorder %s161, %s164
      %p170 = scmp.eq.s32.totalorder %s14, 0
      %p171 = por %p169, %p170
      %p172 = scmp.ne.s32.totalorder %s161, %s164
      %p173 = scmp.eq.s32.totalorder %s19, 1
      %p174 = por %p172, %p173
      %p175 = scmp.ne.s32.totalorder %s164, %s165
      %p176 = scmp.eq.s32.totalorder %s19, 0
      %p177 = por %p175, %p176
      %p178 = scmp.ne.s32.totalorder %s164, %s165
      %p179 = scmp.eq.s32.totalorder %s20, 1
      %p180 = por %p178, %p179
      %p182 = scmp.ne.s32.totalorder %s165, %s181
      %p183 = scmp.eq.s32.totalorder %s20, 0
      %p184 = por %p182, %p183
      %p185 = scmp.le.s32.totalorder 1, %s14
      %p186 = scmp.lt.s32.totalorder %s14, 3
      %p187 = pnand %p185, %p186
      %p188 = pneg %p187
      // Predicated region
      $region9: #{tpu_custom_call.1} parent=5 // pred_check
        _
      $region10: #{tpu_custom_call.1} parent=5 // pred_check_branch
        %190 = sbr.rel (%p187) target = $region12
      $region11: #{tpu_custom_call.1} parent=5 // pred_region
        %s191 = ssub.s32 %s14, 1
        // Predicated region
        $region13: #{tpu_custom_call.1} parent=11 // pred_check
          %p192 = pneg %p78
        $region14: #{tpu_custom_call.1} parent=11 // pred_check_branch
          %194 = sbr.rel (%p192) target = $region16
        $region15: #{tpu_custom_call.1} parent=11 // pred_region
          %p195 = scmp.lt.s32.totalorder %s24, 0
          %s196 = scalar_select %p195, %s24, 0
          %s197 = smul.addr %s196, 4
          %s198 = scalar_lea.vmem %s1, %s197
        $region16: #{tpu_custom_call.1} parent=11 // pred_fallthru
          _
        // Predicated region
        $region17: #{tpu_custom_call.1} parent=11 // pred_check
          %p199 = pneg %p104
        $region18: #{tpu_custom_call.1} parent=11 // pred_check_branch
          %201 = sbr.rel (%p199) target = $region20
        $region19: #{tpu_custom_call.1} parent=11 // pred_region
          %p202 = scmp.lt.s32.totalorder %s24, 0
          %s203 = scalar_select %p202, %s24, 0
          %s204 = scalar_lea.vmem %s2, %s203
        $region20: #{tpu_custom_call.1} parent=11 // pred_fallthru
          _
        // Predicated region
        $region21: #{tpu_custom_call.1} parent=11 // pred_check
          %p205 = pneg %p130
        $region22: #{tpu_custom_call.1} parent=11 // pred_check_branch
          %207 = sbr.rel (%p205) target = $region24
        $region23: #{tpu_custom_call.1} parent=11 // pred_region
          %s208 = smul.u32 16, %s24
          %p209 = scmp.lt.s32.totalorder %s208, 15
          %s210 = scalar_select %p209, %s208, 15
          %s211 = smul.addr %s210, 4
          %s212 = scalar_lea.vmem %s3, %s211
          %s213 = smul.u32 16, %s24
        $region24: #{tpu_custom_call.1} parent=11 // pred_fallthru
          _
        // Predicated region
        $region25: #{tpu_custom_call.1} parent=11 // pred_check
          %p214 = pneg %p151
        $region26: #{tpu_custom_call.1} parent=11 // pred_check_branch
          %216 = sbr.rel (%p214) target = $region28
        $region27: #{tpu_custom_call.1} parent=11 // pred_region
          _
        $region28: #{tpu_custom_call.1} parent=11 // pred_fallthru
          _
      $region12: #{tpu_custom_call.1} parent=5 // pred_fallthru
        _
      %p217 = scmp.lt.s32.totalorder %s14, 2
      // Predicated region
      $region29: #{tpu_custom_call.1} parent=5 // pred_check
        %p218 = pneg %p217
      $region30: #{tpu_custom_call.1} parent=5 // pred_check_branch
        %220 = sbr.rel (%p218) target = $region32
      $region31: #{tpu_custom_call.1} parent=5 // pred_region
        // Predicated region
        $region33: #{tpu_custom_call.1} parent=31 // pred_check
          %p221 = pneg %p46
        $region34: #{tpu_custom_call.1} parent=31 // pred_check_branch
          %223 = sbr.rel (%p221) target = $region36
        $region35: #{tpu_custom_call.1} parent=31 // pred_region
          %p224 = scmp.lt.s32.totalorder %s21, 1
          %s225 = scalar_select %p224, %s21, 1
          %s226 = smul.addr %s225, 4
          %s227 = scalar_lea.vmem %s0, %s226
        $region36: #{tpu_custom_call.1} parent=31 // pred_fallthru
          _
      $region32: #{tpu_custom_call.1} parent=5 // pred_fallthru
        _
      %p228 = scmp.le.s32.totalorder 1, %s14
      %p229 = scmp.lt.s32.totalorder %s14, 3
      %p230 = pnand %p228, %p229
      %p231 = pneg %p230
      // Predicated region
      $region37: #{tpu_custom_call.1} parent=5 // pred_check
        _
      $region38: #{tpu_custom_call.1} parent=5 // pred_check_branch
        %233 = sbr.rel (%p230) target = $region40
      $region39: #{tpu_custom_call.1} parent=5 // pred_region
        %s234 = ssub.s32 %s14, 1
        %p235 = scmp.lt.s32.totalorder %s23, 1
        %s236 = scalar_select %p235, %s23, 1
        %s237 = smul.addr %s236, 4
        %s238 = scalar_lea.vmem %s0, %s237
        %p239 = pneg %p52
        %p240 = pneg %p49
        %p241 = scmp.lt.s32.totalorder %s24, 0
        %s242 = scalar_select %p241, %s24, 0
        %s243 = smul.addr %s242, 4
        %s244 = scalar_lea.vmem %s1, %s243
        %p245 = pneg %p78
        %p246 = pneg %p75
        %p247 = scmp.lt.s32.totalorder %s24, 0
        %s248 = scalar_select %p247, %s24, 0
        %s249 = scalar_lea.vmem %s2, %s248
        %p250 = pneg %p104
        %p251 = pneg %p101
        %s252 = smul.u32 16, %s24
        %p253 = scmp.lt.s32.totalorder %s252, 15
        %s254 = scalar_select %p253, %s252, 15
        %s255 = smul.addr %s254, 4
        %s256 = scalar_lea.vmem %s3, %s255
        %p257 = pneg %p130
        %p258 = pneg %p127
        %p259 = pneg %p151
        %p260 = pneg %p148
        %p261 = pneg %p177
        %p262 = pneg %p174
        %s263 = sand.u32 %s164, 1
        %s264 = scalar_lea.sflag [#allocation4], %s263
        %s265 = sand.u32 %s164, 1
        %s266 = smul.addr %s265, 4
        %s267 = scalar_lea.vmem [#allocation3], %s266
        %p268 = scmp.lt.s32.totalorder %s23, 1
        %s269 = scalar_select %p268, %s23, 1
        %s270 = smul.addr %s269, 4
        %s271 = scalar_lea.vmem %s0, %s270
        %p272 = scmp.lt.s32.totalorder %s24, 0
        %s273 = scalar_select %p272, %s24, 0
        %s274 = smul.addr %s273, 4
        %s275 = scalar_lea.vmem %s1, %s274
        %p276 = scmp.lt.s32.totalorder %s24, 0
        %s277 = scalar_select %p276, %s24, 0
        %s278 = scalar_lea.vmem %s2, %s277
        %s279 = smul.u32 16, %s24
        %p280 = scmp.lt.s32.totalorder %s279, 15
        %s281 = scalar_select %p280, %s279, 15
        %s282 = smul.addr %s281, 4
        %s283 = scalar_lea.vmem %s3, %s282
        %s284 = smul.u32 16, %s24
        %p286 = scmp.eq.s32.totalorder %s24, 0
        // Predicated region
        $region41: #{tpu_custom_call.1} parent=39 // pred_check
          %p287 = pneg %p286
        $region42: #{tpu_custom_call.1} parent=39 // pred_check_branch
          %289 = sbr.rel (%p287) target = $region44
        $region43: #{tpu_custom_call.1} parent=39 // pred_region
          %vm290 = vcmask 261120
          %291 = vst.msk [vmem:[#allocation2] sm:$0xff] %vm290, 0.0
        $region44: #{tpu_custom_call.1} parent=39 // pred_fallthru
          _
        %v292 = vld [vmem:[%s271] sm:$0xf]
        %v293 = vld [vmem:[%s275] sm:$0xf]
        %v294 = vld [vmem:[%s275 + $0x4] sm:$0xf]
        %v295 = vld [vmem:[%s275 + $0x8] sm:$0xf]
        %v296 = vld [vmem:[%s275 + $0xc] sm:$0xf]
        %v297 = vld [vmem:[%s278] sm:$0x1]
        %v299 = vlaneseq
        %v300 = vshrl.u32 %v299, 7
        %v301 = vsub.s32 0, %v300
        %v302 = vrot.slane %v297, %v301
        %v308 = vunpack.c.l.b16 %v293
        %v309 = vunpack.c.l.b16 %v294
        %v310 = vunpack.c.l.b16 %v295
        %v311 = vunpack.c.l.b16 %v296
        %v312 = vpack.c.b16 %v309, %v308
        %v313 = vpack.c.b16 %v311, %v310
        %vm316 = vcmask 261120
        %v318 = vsel %vm316, %v292, 0
        %320 = vmatprep.subr.bf16.mxu0 0
        %321 = vmatpush1.bf16.msra.mxu0 0
        %322 = vmatprep.subr.bf16.mxu0 0
        %323 = vmatpush1.bf16.msra.mxu0 0
        %324 = vmatprep.subr.bf16.mxu0 0
        %325 = vmatpush1.bf16.msra.mxu0 0
        %326 = vmatprep.subr.bf16.mxu0 0
        %327 = vmatpush1.bf16.msra.mxu0 0
        %328 = vmatprep.subr.bf16.mxu0 0
        %329 = vmatpush1.bf16.msra.mxu0 0
        %330 = vmatprep.subr.bf16.mxu0 0
        %331 = vmatpush1.bf16.msra.mxu0 0
        %332 = vmatprep.subr.bf16.mxu0 0
        %333 = vmatpush1.bf16.msra.mxu0 %v313
        %334 = vmatprep.subr.bf16.mxu0 0
        %335 = vmatpush1.bf16.msra.mxu0 %v312
        %336 = vmatprep.subr.bf16.mxu0 0
        %337 = vmatpush2.bf16.msra.mxu0 0
        %338 = vmatprep.subr.bf16.mxu0 0
        %339 = vmatpush2.bf16.msra.mxu0 0
        %340 = vmatprep.subr.bf16.mxu0 0
        %341 = vmatpush2.bf16.msra.mxu0 0
        %342 = vmatprep.subr.bf16.mxu0 0
        %343 = vmatpush2.bf16.msra.mxu0 0
        %344 = vmatprep.subr.bf16.mxu0 0
        %345 = vmatpush2.bf16.msra.mxu0 0
        %346 = vmatprep.subr.bf16.mxu0 0
        %347 = vmatpush2.bf16.msra.mxu0 0
        %348 = vmatprep.subr.bf16.mxu0 0
        %349 = vmatpush2.bf16.msra.mxu0 0
        %350 = vmatprep.subr.bf16.mxu0 0
        %351 = vmatpush2.bf16.msra.mxu0 0
        %352 = vmatprep.mubr.bf16.mxu0 0
        %353 = vmatmul.mubr.bf16.gmra.mxu0 %v318
        %v354 = vpop.f32.mrf.mxu0
        %v355 = vadd.f32 %v302, %v354
        %v356 = vpop.f32.mrf.mxu0
        %v357 = vpop.f32.mrf.mxu0
        %v358 = vpop.f32.mrf.mxu0
        %359 = vdwg.mxu0
        %v360 = vmul.f32 %v355, 0.5
        %v361 = vmul.f32 %v355, 0.044715
        %v362 = vmul.f32 %v361, %v355
        %v363 = vmul.f32 %v362, %v355
        %v364 = vadd.f32 %v355, %v363
        %v365 = vmul.f32 %v364, 0.7978846
        %v366 = vtanh.pop %v365
        %v367 = vadd.f32 %v366, 1.0
        %v368 = vmul.f32 %v360, %v367
        %v369 = vpack.c.bf16 %v368, %v368
        %v370 = vld [vmem:[#allocation2] sm:$0xff]
        %v371 = vld [vmem:[%s283] sm:$0xf]
        %v372 = vld [vmem:[%s283 + $0x4] sm:$0xf]
        %v373 = vld [vmem:[%s283 + $0x8] sm:$0xf]
        %v374 = vld [vmem:[%s283 + $0xc] sm:$0xf]
        %v375 = vld [vmem:[%s283 + $0x10] sm:$0xf]
        %v376 = vld [vmem:[%s283 + $0x14] sm:$0xf]
        %v377 = vld [vmem:[%s283 + $0x18] sm:$0xf]
        %v378 = vld [vmem:[%s283 + $0x1c] sm:$0xf]
        %v379 = vld [vmem:[%s283 + $0x20] sm:$0xf]
        %v380 = vld [vmem:[%s283 + $0x24] sm:$0xf]
        %v381 = vld [vmem:[%s283 + $0x28] sm:$0xf]
        %v382 = vld [vmem:[%s283 + $0x2c] sm:$0xf]
        %v383 = vld [vmem:[%s283 + $0x30] sm:$0xf]
        %v384 = vld [vmem:[%s283 + $0x34] sm:$0xf]
        %v385 = vld [vmem:[%s283 + $0x38] sm:$0xf]
        %v386 = vld [vmem:[%s283 + $0x3c] sm:$0xf]
        %v403 = vunpack.c.l.b16 %v371
        %v404 = vunpack.c.l.b16 %v372
        %v405 = vunpack.c.l.b16 %v373
        %v406 = vunpack.c.l.b16 %v374
        %v407 = vunpack.c.l.b16 %v375
        %v408 = vunpack.c.l.b16 %v376
        %v409 = vunpack.c.l.b16 %v377
        %v410 = vunpack.c.l.b16 %v378
        %v411 = vunpack.c.l.b16 %v379
        %v412 = vunpack.c.l.b16 %v380
        %v413 = vunpack.c.l.b16 %v381
        %v414 = vunpack.c.l.b16 %v382
        %v415 = vunpack.c.l.b16 %v383
        %v416 = vunpack.c.l.b16 %v384
        %v417 = vunpack.c.l.b16 %v385
        %v418 = vunpack.c.l.b16 %v386
        %v419 = vpack.c.b16 %v404, %v403
        %v420 = vpack.c.b16 %v406, %v405
        %v421 = vpack.c.b16 %v408, %v407
        %v422 = vpack.c.b16 %v410, %v409
        %v423 = vpack.c.b16 %v412, %v411
        %v424 = vpack.c.b16 %v414, %v413
        %v425 = vpack.c.b16 %v416, %v415
        %v426 = vpack.c.b16 %v418, %v417
        %435 = vmatprep.subr.bf16.mxu0 0
        %436 = vmatpush1.bf16.msra.mxu0 %v426
        %437 = vmatprep.subr.bf16.mxu0 0
        %438 = vmatpush1.bf16.msra.mxu0 %v425
        %439 = vmatprep.subr.bf16.mxu0 0
        %440 = vmatpush1.bf16.msra.mxu0 %v424
        %441 = vmatprep.subr.bf16.mxu0 0
        %442 = vmatpush1.bf16.msra.mxu0 %v423
        %443 = vmatprep.subr.bf16.mxu0 0
        %444 = vmatpush1.bf16.msra.mxu0 %v422
        %445 = vmatprep.subr.bf16.mxu0 0
        %446 = vmatpush1.bf16.msra.mxu0 %v421
        %447 = vmatprep.subr.bf16.mxu0 0
        %448 = vmatpush1.bf16.msra.mxu0 %v420
        %449 = vmatprep.subr.bf16.mxu0 0
        %450 = vmatpush1.bf16.msra.mxu0 %v419
        %451 = vmatprep.subr.bf16.mxu0 0
        %452 = vmatpush2.bf16.msra.mxu0 0
        %453 = vmatprep.subr.bf16.mxu0 0
        %454 = vmatpush2.bf16.msra.mxu0 0
        %455 = vmatprep.subr.bf16.mxu0 0
        %456 = vmatpush2.bf16.msra.mxu0 0
        %457 = vmatprep.subr.bf16.mxu0 0
        %458 = vmatpush2.bf16.msra.mxu0 0
        %459 = vmatprep.subr.bf16.mxu0 0
        %460 = vmatpush2.bf16.msra.mxu0 0
        %461 = vmatprep.subr.bf16.mxu0 0
        %462 = vmatpush2.bf16.msra.mxu0 0
        %463 = vmatprep.subr.bf16.mxu0 0
        %464 = vmatpush2.bf16.msra.mxu0 0
        %465 = vmatprep.subr.bf16.mxu0 0
        %466 = vmatpush2.bf16.msra.mxu0 0
        %467 = vmatprep.mubr.bf16.mxu0 0
        %468 = vmatmul.mubr.bf16.gmra.mxu0 %v369
        %v469 = vpop.f32.mrf.mxu0
        %v470 = vadd.f32 0.0, %v469
        %v471 = vpop.f32.mrf.mxu0
        %v472 = vpop.f32.mrf.mxu0
        %v473 = vpop.f32.mrf.mxu0
        %474 = vdwg.mxu0
        %v475 = vadd.f32 %v370, %v470
        %476 = vst.msk [vmem:[#allocation2] sm:$0xff] %vm316, %v475
        // Predicated region
        $region45: #{tpu_custom_call.1} parent=39 // pred_check
          %p477 = pneg %p286
        $region46: #{tpu_custom_call.1} parent=39 // pred_check_branch
          %479 = sbr.rel (%p477) target = $region48
        $region47: #{tpu_custom_call.1} parent=39 // pred_region
          %v480 = vld [vmem:[#allocation2] sm:$0xff]
          %v481 = vld [vmem:[%s4] sm:$0x1]
          %v483 = vlaneseq
          %v484 = vshrl.u32 %v483, 7
          %v485 = vsub.s32 0, %v484
          %v486 = vrot.slane %v481, %v485
          %v488 = vadd.f32 %v480, %v486
          %v489 = vpack.c.bf16 %v488, %v488
          %vm490 = vcmask 257024
          %491 = vst.msk [vmem:[%s267] sm:$0xf] %vm490, %v489
        $region48: #{tpu_custom_call.1} parent=39 // pred_fallthru
          _
        %s492 = sand.u32 %s164, 1
        %s493 = scalar_lea.sflag [#allocation4], %s492
        %s494 = sand.u32 %s164, 1
        %s495 = smul.addr %s494, 4
        %s496 = scalar_lea.vmem [#allocation3], %s495
        // Predicated region
        $region49: #{tpu_custom_call.1} parent=39 // pred_check
          %p497 = pneg %p174
        $region50: #{tpu_custom_call.1} parent=39 // pred_check_branch
          %499 = sbr.rel (%p497) target = $region52
        $region51: #{tpu_custom_call.1} parent=39 // pred_region
          %s501 = ssub.s32 64, 64
          %502 = vsyncadd %s493, %s501
          %s503 = smul.addr %s23, 64
          %s504 = scalar_lea.hbm %s5, %s503
          %s506 = sshll.u32 %s496, 4
          %s507 = int_to_ptr.vmem [resolvable:$true] %s506
          %509 = dma.vmem_to_hbm [thread:$0]  %s507, 64, %s504, %s493
        $region52: #{tpu_custom_call.1} parent=39 // pred_fallthru
          _
      $region40: #{tpu_custom_call.1} parent=5 // pred_fallthru
        _
      %p510 = scmp.le.s32.totalorder 2, %s14
      // Predicated region
      $region53: #{tpu_custom_call.1} parent=5 // pred_check
        %p511 = pneg %p510
      $region54: #{tpu_custom_call.1} parent=5 // pred_check_branch
        %513 = sbr.rel (%p511) target = $region56
      $region55: #{tpu_custom_call.1} parent=5 // pred_region
        %s514 = ssub.s32 %s14, 2
        // Predicated region
        $region57: #{tpu_custom_call.1} parent=55 // pred_check
          %p515 = pneg %p180
        $region58: #{tpu_custom_call.1} parent=55 // pred_check_branch
          %517 = sbr.rel (%p515) target = $region60
        $region59: #{tpu_custom_call.1} parent=55 // pred_region
          %s518 = sand.u32 %s165, 1
          %s519 = scalar_lea.sflag [#allocation4], %s518
          %s520 = sand.u32 %s165, 1
          %s521 = smul.addr %s520, 4
          %s522 = scalar_lea.vmem [#allocation3], %s521
          %523 = dma.done %s519, 64
        $region60: #{tpu_custom_call.1} parent=55 // pred_fallthru
          _
      $region56: #{tpu_custom_call.1} parent=5 // pred_fallthru
        _
    $region6: #{tpu_custom_call.1} parent=1 // loop_footer
      %s18 = sadd.s32 1, %s14
    $region7: #{tpu_custom_call.1} parent=1 // loop_footer_branch
      %13 = sbr.rel target = $region3
    $region8: #{tpu_custom_call.1} parent=1 // loop_exit
      _
    %524 = vsyncpa [#allocation4], 1
    %s525 = scalar_lea.sflag [#allocation4], 1
    %526 = vsyncpa %s525, 1

</llo_original>
